<compile_context>
chip_gen: v7x
topology: tpu7x:2x2x1
jax: 0.10.0
libtpu: 0.0.40
codegen_flags: <defaults>
</compile_context>

<pallas_src>
import functools
import math

import numpy as np
import jax
import jax.numpy as jnp
from jax.experimental import pallas as pl
from jax.experimental.pallas import tpu as pltpu


def _round_up(x, m):
    return (x + m - 1) // m * m


# ----------------------------------------------------------------------------
# One-time probe of pltpu.roll's direction (cached).  We only need to know
# whether pltpu.roll(x, s, axis) == jnp.roll(x, s, axis) or the mirror image.
# ----------------------------------------------------------------------------
_ROLL_MATCHES_JNP = None


def _roll_matches_jnp_roll():
    global _ROLL_MATCHES_JNP
    if _ROLL_MATCHES_JNP is None:
        def probe_kernel(x_ref, o_ref):
            o_ref[...] = pltpu.roll(x_ref[...], shift=1, axis=1)

        x = jnp.arange(8 * 128, dtype=jnp.float32).reshape(8, 128)
        y = pl.pallas_call(
            probe_kernel,
            out_shape=jax.ShapeDtypeStruct((8, 128), jnp.float32),
        )(x)
        _ROLL_MATCHES_JNP = bool(jnp.allclose(y, jnp.roll(x, 1, axis=1)))
    return _ROLL_MATCHES_JNP


# ----------------------------------------------------------------------------
# Kernel: per (batch, spatial-tile) step
#   xs_ref   (lo_t, 2*cp)  row l = [x[2l] | x[2l+1]]          (pairs view)
#   halo_ref (8, cp)       row 0 = x[2*l0 - 1]  (zeros for the first tile)
#   w12_ref  (2*cp, cp)    [W1^T ; W2^T]
#   w0_ref   (cp, cp)      W0^T
#   b_ref    (1, cp)       bias (f32)
#   o_ref    (cp, lo_t)    NCL-native output tile
# ----------------------------------------------------------------------------
def _make_kernel(cp, roll_shift):
    def kernel(xs_ref, halo_ref, w12_ref, w0_ref, b_ref, o_ref):
        lo_t = xs_ref.shape[0]
        xs = xs_ref[...]                                     # (lo_t, 2*cp)

        # Center (k=1) and right (k=2) taps for every output row, plus bias.
        acc = jnp.dot(xs, w12_ref[...], preferred_element_type=jnp.float32)
        acc = acc + b_ref[...]

        # Left tap (k=0): x[2l+1] contributes to output row l+1.  Park the
        # tile's halo row (x[2*l0 - 1]) in the last source row; after the
        # one-column rotate below it lands on output row 0 of this tile.
        odd = xs[:, cp:]
        rows = jax.lax.broadcasted_iota(jnp.int32, odd.shape, 0)
        odd = jnp.where(rows == lo_t - 1, halo_ref[0:1, :], odd)
        t0 = jnp.dot(odd, w0_ref[...], preferred_element_type=jnp.float32)

        # NCL-native store: channels -> sublanes, positions -> lanes.  The
        # transposes and the rotate ride the otherwise-idle XLU.
        out = jnp.transpose(acc) + pltpu.roll(
            jnp.transpose(t0), shift=roll_shift, axis=1)
        o_ref[...] = out.astype(o_ref.dtype)

    return kernel


@functools.partial(jax.jit, static_argnames=("use_bf16", "roll_fwd"))
def _downsample1d_impl(x_ncl, weight, bias, *, use_bf16, roll_fwd):
    n, c, l = x_ncl.shape
    lo = (l + 1) // 2                      # PyTorch output length for k=3,s=2,p=1
    cp = _round_up(c, 128)                 # lane-dense channel width
    in_dtype = jnp.bfloat16 if use_bf16 else jnp.float32
    in_b = jnp.dtype(in_dtype).itemsize

    # ---- per-generation VMEM budget & spatial tiling ------------------------
    try:
        phys_vmem = int(pltpu.get_tpu_info().vmem_capacity_bytes)
    except Exception:                      # conservative: v7x has 64 MiB / core
        phys_vmem = 64 * 1024 * 1024
    vmem_limit = min(phys_vmem - 16 * 1024 * 1024, 110 * 1024 * 1024)
    budget = vmem_limit - (4 << 20)

    def vmem_need(lt):
        tiles = 2 * lt * 2 * cp * in_b + 2 * cp * lt * 4 + 2 * 8 * cp * in_b
        weights = 2 * 3 * cp * cp * in_b + 2 * cp * 4   # double-buffered (see TODO)
        interm = 6 * lt * cp * 4 + lt * 2 * cp * in_b   # in-kernel temporaries
        return tiles + weights + interm + (2 << 20)

    lo_t = min(1024, _round_up(lo, 128))   # tiles are multiples of 128 rows
    while lo_t > 128 and vmem_need(lo_t) > budget:
        lo_t -= 128
    n_t = -(-lo // lo_t)
    if n * n_t < 2 and lo_t > 128:
        # keep >=2 grid steps so both v7x TensorCores get work at small N
        lo_t = _round_up(-(-lo // 2), 128)
        n_t = -(-lo // lo_t)
    lo_pad = n_t * lo_t
    lpad2 = 2 * lo_pad

    # ---- wrapper prep: one fused pass (transpose + pad + cast) --------------
    x_nlc = jnp.transpose(x_ncl, (0, 2, 1))
    xr = jnp.pad(x_nlc, ((0, 0), (0, lpad2 - l), (0, cp - c))).astype(in_dtype)
    xs = xr.reshape(n, lo_pad, 2 * cp)     # pairs view: bitcast, no extra copy

    # halo: row 0 of each (8, cp) block holds x[2*t*lo_t - 1] (zeros for t=0)
    starts = np.arange(n_t) * (2 * lo_t) - 1
    halo_rows = xr[:, np.maximum(starts, 0), :]            # (n, n_t, cp)
    halo_rows = halo_rows * jnp.asarray(starts >= 0, dtype=in_dtype)[None, :, None]
    halo = jnp.pad(halo_rows[:, :, None, :], ((0, 0), (0, 0), (0, 7), (0, 0)))

    # weights: PyTorch (C_out, C_in, 3) -> W0^T (cp,cp), [W1^T; W2^T] (2cp,cp)
    wt = jnp.transpose(weight, (2, 1, 0))                   # (3, C_in, C_out)
    wt = jnp.pad(wt, ((0, 0), (0, cp - c), (0, cp - c))).astype(in_dtype)
    w0 = wt[0]
    w12 = wt[1:].reshape(2 * cp, cp)
    b2 = jnp.pad(bias.astype(jnp.float32), (0, cp - c)).reshape(1, cp)

    roll_shift = 1 if roll_fwd else lo_t - 1               # both mean "+1 column"
    kernel = _make_kernel(cp, roll_shift)

    out = pl.pallas_call(
        kernel,
        out_shape=jax.ShapeDtypeStruct((n, cp, lo_pad), x_ncl.dtype),
        grid_spec=pltpu.PrefetchScalarGridSpec(
            num_scalar_prefetch=0,
            grid=(n, n_t),
            in_specs=[
                pl.BlockSpec((None, lo_t, 2 * cp), lambda b, t: (b, t, 0)),
                pl.BlockSpec((None, None, 8, cp), lambda b, t: (b, t, 0, 0)),
                # weights / bias: constant block index -> fetched once, resident
                pl.BlockSpec((2 * cp, cp), lambda b, t: (0, 0)),
                pl.BlockSpec((cp, cp), lambda b, t: (0, 0)),
                pl.BlockSpec((1, cp), lambda b, t: (0, 0)),
            ],
            out_specs=pl.BlockSpec((None, cp, lo_t), lambda b, t: (b, 0, t)),
        ),
        compiler_params=pltpu.CompilerParams(
            dimension_semantics=("parallel", "parallel"),
            vmem_limit_bytes=vmem_limit,
        ),
    )(xs, halo, w12, w0, b2)

    if cp == c and lo_pad == lo:
        return out
    return out[:, :c, :lo]


def downsample1d(x_ncl, weight, bias, *, use_bf16=False):
    """Conv1d(dim, dim, kernel=3, stride=2, padding=1), PyTorch NCL layout.

    x_ncl:  (N, C, L) float32, weight: (C, C, 3), bias: (C,)
    returns (N, C, (L + 1) // 2)
    """
    return _downsample1d_impl(
        x_ncl, weight, bias, use_bf16=use_bf16, roll_fwd=_roll_matches_jnp_roll())


# ----------------------------------------------------------------------------
# Reference (host numpy, float64) and test harness
# ----------------------------------------------------------------------------
def _reference_conv1d(x_ncl, weight, bias):
    x = np.asarray(x_ncl, np.float64)
    w = np.asarray(weight, np.float64)
    b = np.asarray(bias, np.float64)
    n, c, l = x.shape
    lo = (l + 1) // 2
    xp = np.pad(x, ((0, 0), (0, 0), (1, 1)))
    out = np.tile(b.reshape(1, -1, 1), (n, 1, lo))
    for k in range(3):
        taps = xp[:, :, k:k + 2 * lo - 1:2]        # x[2l - 1 + k]
        out += np.einsum('oi,nil->nol', w[:, :, k], taps)
    return out


def _make_params(key, dim):
    kw, kb = jax.random.split(key)
    fan_in = dim * 3
    bound = 1.0 / math.sqrt(fan_in)
    weight = jax.random.uniform(kw, (dim, dim, 3), jnp.float32, -bound, bound)
    bias = jax.random.uniform(kb, (dim,), jnp.float32, -bound, bound)
    return weight, bias


if __name__ == "__main__":
    key = jax.random.PRNGKey(0)
    k1, k2, k3, k4 = jax.random.split(key, 4)

    # Small shapes consistent with the module: batch=2, channels=4, length=16.
    batch, dim, length = 2, 4, 16
    x = jax.random.normal(k1, (batch, dim, length), dtype=jnp.float32)
    weight, bias = _make_params(k2, dim)

    out = jax.block_until_ready(downsample1d(x, weight, bias))
    ref = _reference_conv1d(x, weight, bias)
    assert out.shape == (batch, dim, (length + 1) // 2), out.shape
    assert np.allclose(np.asarray(out), ref, atol=1e-4, rtol=1e-4), \
        "mismatch vs reference conv"

    # Odd length, single batch -> forces a 2-way spatial split: exercises the
    # cross-tile halo row, the forced megacore split, and left/right padding.
    batch2, dim2, length2 = 1, 5, 515
    x2 = jax.random.normal(k3, (batch2, dim2, length2), dtype=jnp.float32)
    weight2, bias2 = _make_params(k4, dim2)

    out2 = jax.block_until_ready(downsample1d(x2, weight2, bias2))
    ref2 = _reference_conv1d(x2, weight2, bias2)
    assert out2.shape == (batch2, dim2, (length2 + 1) // 2), out2.shape
    assert np.allclose(np.asarray(out2), ref2, atol=1e-4, rtol=1e-4), \
        "mismatch vs reference conv (tiled)"

    print("KERNEL_OK")
</pallas_src>

<mosaic_0001>
module attributes {stable_mosaic.version = 11 : i64} {
  func.func @probe_kernel(%arg0: memref<8x128xf32, #tpu.memory_space<vmem>>, %arg1: memref<8x128xf32, #tpu.memory_space<vmem>>) attributes {dimension_semantics = [], scalar_prefetch = 0 : i64, scratch_operands = 0 : i64, tpu.core_type = #tpu.core_type<tc>} {
    %c0 = arith.constant 0 : index
    %c0_0 = arith.constant 0 : index
    %0 = vector.load %arg0[%c0, %c0_0] : memref<8x128xf32, #tpu.memory_space<vmem>>, vector<8x128xf32>
    %c1_i32 = arith.constant 1 : i32
    %1 = tpu.dynamic_rotate %0 by %c1_i32 dim 1 : vector<8x128xf32>, i32 -> vector<8x128xf32>
    %c0_1 = arith.constant 0 : index
    %c0_2 = arith.constant 0 : index
    %2 = vector.load %arg1[%c0_1, %c0_2] : memref<8x128xf32, #tpu.memory_space<vmem>>, vector<8x128xf32>
    tpu.vector_store %arg1[%c0_1, %c0_2], %1 {strides = array<i32>} : memref<8x128xf32, #tpu.memory_space<vmem>>, vector<8x128xf32>,
    return
  }
}

</mosaic_0001>

<llo_original>
// kernel: tpu_custom_call.1
$region0: #{tpu_custom_call.1}
  #allocation0 [shape = 'u32[]', space=smem, size = 0x4, offset = 0x4, fixed_abs, tag = 'smem constant byte address 0x4 - core index']
  #allocation1 [shape = 'u32[144,128]{1,0:T(1,128)}', space=vmem, size = 0x12000, scoped, tag = 'internal scratch']
  %s0 = inlined_call_operand.hbm [shape: f32[8,128], index: 0, kind: input, shape index: {}]
  %s1 = inlined_call_operand.hbm [shape: f32[8,128], index: 1, kind: output, shape index: {}]
  %s2 = sld [smem:[#allocation0]]
  $region18: #{tpu_custom_call.1} parent=0
    _
  %s4 = ssub.s32 1, %s2
  %s5 = scalar_select 0, %s4, %s2
  $region1: #{tpu_custom_call.1} parent=0
    #allocation2 [shape = 'u8[4096]{0}', space=vmem, size = 0x1000, scoped, tag = 'input window, operand 0, single buffered']
    #allocation3 [shape = 's32[1]{0}', space=sflag, size = 0x4, scoped, tag = 'scoped memory for tpu_custom_call.1']
    #allocation4 [shape = 's32[1]{0}', space=sflag, size = 0x4, scoped, tag = 'scoped memory for tpu_custom_call.1']
    #allocation5 [shape = 'u8[4096]{0}', space=vmem, size = 0x1000, scoped, tag = 'output window, operand 0, single buffered']
    %6 = vsyncpa [#allocation3], 0
    %7 = vsyncpa [#allocation4], 0
    // Predicated region
    $region2: #{tpu_custom_call.1} parent=1 // pred_check
      _
    $region3: #{tpu_custom_call.1} parent=1 // pred_check_branch
      %9 = sbr.rel (0) target = $region5
    $region4: #{tpu_custom_call.1} parent=1 // pred_region
      %s11 = ssub.s32 128, 128
      %12 = vsyncadd [#allocation3], %s11
      %s14 = sshll.u32 [#allocation2], 4
      %s15 = int_to_ptr.vmem [resolvable:$true] %s14
      %17 = dma.hbm_to_vmem [thread:$0]  %s0, 128, %s15, [#allocation3]
    $region5: #{tpu_custom_call.1} parent=1 // pred_fallthru
      _
    // Predicated region
    $region6: #{tpu_custom_call.1} parent=1 // pred_check
      _
    $region7: #{tpu_custom_call.1} parent=1 // pred_check_branch
      %19 = sbr.rel (0) target = $region9
    $region8: #{tpu_custom_call.1} parent=1 // pred_region
      %20 = dma.done [#allocation3], 128
    $region9: #{tpu_custom_call.1} parent=1 // pred_fallthru
      _
    %v21 = vld [vmem:[#allocation2] sm:$0xff]
    %22 = vrot.lane.b32.xlu0 %v21, 1
    %v23 = vpop.permute.xlu0 %22
    %24 = vst [vmem:[#allocation5] sm:$0xff] %v23
    // Predicated region
    $region10: #{tpu_custom_call.1} parent=1 // pred_check
      _
    $region11: #{tpu_custom_call.1} parent=1 // pred_check_branch
      %26 = sbr.rel (0) target = $region13
    $region12: #{tpu_custom_call.1} parent=1 // pred_region
      %s28 = ssub.s32 128, 128
      %29 = vsyncadd [#allocation4], %s28
      %s31 = sshll.u32 [#allocation5], 4
      %s32 = int_to_ptr.vmem [resolvable:$true] %s31
      %34 = dma.vmem_to_hbm [thread:$0]  %s32, 128, %s1, [#allocation4]
    $region13: #{tpu_custom_call.1} parent=1 // pred_fallthru
      _
    // Predicated region
    $region14: #{tpu_custom_call.1} parent=1 // pred_check
      _
    $region15: #{tpu_custom_call.1} parent=1 // pred_check_branch
      %36 = sbr.rel (0) target = $region17
    $region16: #{tpu_custom_call.1} parent=1 // pred_region
      %37 = dma.done [#allocation4], 128
    $region17: #{tpu_custom_call.1} parent=1 // pred_fallthru
      _
    %38 = vsyncpa [#allocation3], 1
    %39 = vsyncpa [#allocation4], 1

</llo_original>
